<compile_context>
chip_gen: v5e
topology: v5e:2x2
jax: 0.10.0
libtpu: 0.0.40
codegen_flags: <defaults>
</compile_context>

<pallas_src>
import jax
import jax.numpy as jnp
from jax.experimental import pallas as pl
from jax.experimental.pallas import tpu as pltpu


# ----------------------------- Pallas kernel -------------------------------

def _make_fused_gcn_kernel(num_layers):
    """Fused kernel for `num_layers` GCN layers (BN already folded on host).

    Ref order: adj, x, (w_0, b_0), ..., (w_{L-1}, b_{L-1}), emb_out, pred_out.
    adj / x / w refs are bf16; bias refs and outputs are f32.
    """
    def kernel(*refs):
        adj_ref, x_ref = refs[0], refs[1]
        w_refs = refs[2:2 + 2 * num_layers:2]
        b_refs = refs[3:2 + 2 * num_layers:2]
        emb_ref, pred_ref = refs[-2], refs[-1]

        adj = adj_ref[...]          # bf16 [N, N]
        h = x_ref[...]              # bf16 [N, C_in]

        for li in range(num_layers):
            w = w_refs[li][...]     # bf16 [C_in, C_out]
            b = b_refs[li][...]     # f32  [1, C_out]
            c_in, c_out = w.shape
            if c_in < c_out:
                # (A @ X) @ W : contract the N x N matmul over the narrow dim.
                ax = jnp.dot(adj, h, preferred_element_type=jnp.float32)
                y = jnp.dot(ax.astype(jnp.bfloat16), w,
                            preferred_element_type=jnp.float32) + b
            else:
                # A @ (X @ W)
                xw = jnp.dot(h, w, preferred_element_type=jnp.float32)
                y = jnp.dot(adj, xw.astype(jnp.bfloat16),
                            preferred_element_type=jnp.float32) + b
            if li < num_layers - 1:
                # BN is folded into (w, b); ReLU; eval-mode dropout = identity.
                y = jnp.maximum(y, 0.0)
                if li == num_layers - 2:
                    emb_ref[...] = y            # global_embeddings
                h = y.astype(jnp.bfloat16)
            else:
                pred_ref[...] = y               # hc_predictions

    return kernel


# ------------------------------ host wrappers ------------------------------

def _fold_bn(w, b, gamma, beta, mean, var, eps=1e-5):
    """Fold eval-mode BatchNorm1d into the preceding linear weights."""
    s = gamma * jax.lax.rsqrt(var + eps)
    return w * s[None, :], (b - mean) * s + beta


def super_macro_gcn_forward(x, adj_t, params):
    """Forward pass matching SuperMacroGCN.forward (eval mode), one pallas_call."""
    convs = params["convs"]
    bns = params["bns"]
    num_layers = len(convs)
    n = x.shape[0]
    hid = convs[0][0].shape[1]
    c_out = convs[-1][0].shape[1]

    # Host-side prep: fold BN, cast matmul operands to bf16, keep biases f32.
    args = [adj_t.astype(jnp.bfloat16), x.astype(jnp.bfloat16)]
    flops = 0
    bytes_accessed = adj_t.size * 2 + x.size * 2
    for li, (w, b) in enumerate(convs):
        if li < num_layers - 1:
            gamma, beta, mean, var = bns[li]
            w, b = _fold_bn(w, b, gamma, beta, mean, var)
        args.append(w.astype(jnp.bfloat16))
        args.append(b.reshape(1, -1).astype(jnp.float32))
        ci, co = w.shape
        flops += 2 * n * n * min(ci, co) + 2 * n * ci * co
        bytes_accessed += w.size * 2 + b.size * 4
    bytes_accessed += n * hid * 4 + n * c_out * 4

    vmem = pl.BlockSpec(memory_space=pltpu.MemorySpace.VMEM)
    out_shapes = (jax.ShapeDtypeStruct((n, hid), jnp.float32),
                  jax.ShapeDtypeStruct((n, c_out), jnp.float32))

    emb, pred = pl.pallas_call(
        _make_fused_gcn_kernel(num_layers),
        out_shape=out_shapes,
        in_specs=[vmem] * len(args),
        out_specs=(vmem, vmem),
        cost_estimate=pl.CostEstimate(flops=flops, transcendentals=0,
                                      bytes_accessed=bytes_accessed),
    )(*args)
    return emb, pred


# ------------------------------ parameter init ------------------------------

def init_params(key, in_channels, hidden_channels, out_channels, num_layers=3):
    dims = [in_channels] + [hidden_channels] * (num_layers - 1) + [out_channels]
    convs, bns = [], []
    for li in range(num_layers):
        key, kw = jax.random.split(key)
        fan_in, fan_out = dims[li], dims[li + 1]
        limit = jnp.sqrt(6.0 / (fan_in + fan_out))  # Glorot uniform (PyG default)
        w = jax.random.uniform(kw, (fan_in, fan_out), jnp.float32, -limit, limit)
        b = jnp.zeros((fan_out,), jnp.float32)
        convs.append((w, b))
        if li < num_layers - 1:
            key, kg, kb, km, kv = jax.random.split(key, 5)
            gamma = 1.0 + 0.1 * jax.random.normal(kg, (fan_out,), jnp.float32)
            beta = 0.1 * jax.random.normal(kb, (fan_out,), jnp.float32)
            mean = 0.1 * jax.random.normal(km, (fan_out,), jnp.float32)
            var = 0.5 + jnp.abs(jax.random.normal(kv, (fan_out,), jnp.float32))
            bns.append((gamma, beta, mean, var))
    return {"convs": convs, "bns": bns}


def make_normalized_adj(key, n):
    """Dense symmetric normalized adjacency with self loops: D^-1/2 (A+I) D^-1/2."""
    a = (jax.random.uniform(key, (n, n)) < 0.2).astype(jnp.float32)
    a = jnp.maximum(a, a.T)
    a = a + jnp.eye(n, dtype=jnp.float32)
    a = jnp.minimum(a, 1.0)
    deg = a.sum(axis=1)
    dinv = 1.0 / jnp.sqrt(deg)
    return a * dinv[:, None] * dinv[None, :]


def reference_forward(x, adj_t, params):
    """Pure-JAX f32 reference (unfolded BN, canonical A @ (X @ W))."""
    convs, bns = params["convs"], params["bns"]
    h = x
    for i in range(len(convs) - 1):
        w, b = convs[i]
        h = adj_t @ (h @ w) + b
        gamma, beta, mean, var = bns[i]
        h = (h - mean) * jax.lax.rsqrt(var + 1e-5) * gamma + beta
        h = jnp.maximum(h, 0.0)
    emb = h
    w, b = convs[-1]
    pred = adj_t @ (emb @ w) + b
    return emb, pred


# ----------------------------------- main -----------------------------------

if __name__ == "__main__":
    key = jax.random.PRNGKey(0)
    k_x, k_adj, k_p = jax.random.split(key, 3)

    N = 16              # number of graph nodes
    IN_C = 8            # in_channels
    HID_C = 32          # hidden_channels
    OUT_C = 8           # out_channels
    NUM_LAYERS = 3

    x = jax.random.normal(k_x, (N, IN_C), jnp.float32)
    adj_t = make_normalized_adj(k_adj, N)
    params = init_params(k_p, IN_C, HID_C, OUT_C, NUM_LAYERS)

    global_embeddings, hc_predictions = super_macro_gcn_forward(x, adj_t, params)
    jax.block_until_ready((global_embeddings, hc_predictions))

    assert global_embeddings.shape == (N, HID_C)
    assert hc_predictions.shape == (N, OUT_C)

    # Loose check vs. the f32 reference (kernel matmuls run on the bf16 MXU path).
    ref_emb, ref_pred = reference_forward(x, adj_t, params)
    assert jnp.allclose(global_embeddings, ref_emb, atol=0.25, rtol=0.05)
    assert jnp.allclose(hc_predictions, ref_pred, atol=0.25, rtol=0.05)

    print("KERNEL_OK")
</pallas_src>

<mosaic_0001>
module attributes {stable_mosaic.version = 11 : i64} {
  func.func @kernel(%arg0: memref<16x16xbf16, #tpu.memory_space<vmem>>, %arg1: memref<16x8xbf16, #tpu.memory_space<vmem>>, %arg2: memref<8x32xbf16, #tpu.memory_space<vmem>>, %arg3: memref<1x32xf32, #tpu.memory_space<vmem>>, %arg4: memref<32x32xbf16, #tpu.memory_space<vmem>>, %arg5: memref<1x32xf32, #tpu.memory_space<vmem>>, %arg6: memref<32x8xbf16, #tpu.memory_space<vmem>>, %arg7: memref<1x8xf32, #tpu.memory_space<vmem>>, %arg8: memref<16x32xf32, #tpu.memory_space<vmem>>, %arg9: memref<16x8xf32, #tpu.memory_space<vmem>>) attributes {dimension_semantics = [], scalar_prefetch = 0 : i64, scratch_operands = 0 : i64, tpu.core_type = #tpu.core_type<tc>} {
    %c0 = arith.constant 0 : index
    %c0_0 = arith.constant 0 : index
    %0 = vector.load %arg0[%c0, %c0_0] : memref<16x16xbf16, #tpu.memory_space<vmem>>, vector<16x16xbf16>
    %c0_1 = arith.constant 0 : index
    %c0_2 = arith.constant 0 : index
    %1 = vector.load %arg1[%c0_1, %c0_2] : memref<16x8xbf16, #tpu.memory_space<vmem>>, vector<16x8xbf16>
    %c0_3 = arith.constant 0 : index
    %c0_4 = arith.constant 0 : index
    %2 = vector.load %arg2[%c0_3, %c0_4] : memref<8x32xbf16, #tpu.memory_space<vmem>>, vector<8x32xbf16>
    %c0_5 = arith.constant 0 : index
    %c0_6 = arith.constant 0 : index
    %3 = vector.load %arg3[%c0_5, %c0_6] : memref<1x32xf32, #tpu.memory_space<vmem>>, vector<1x32xf32>
    %cst = arith.constant dense<0.000000e+00> : vector<16x8xf32>
    %4 = tpu.matmul %0, %1, %cst {dimension_numbers = #tpu.dot_dimension_numbers<[1], [0], [0], [1], [0, 0, 1, 1], [], []>} : vector<16x16xbf16>, vector<16x8xbf16>, vector<16x8xf32> -> vector<16x8xf32>
    %5 = arith.truncf %4 : vector<16x8xf32> to vector<16x8xbf16>
    %cst_7 = arith.constant dense<0.000000e+00> : vector<16x32xf32>
    %6 = tpu.matmul %5, %2, %cst_7 {dimension_numbers = #tpu.dot_dimension_numbers<[1], [0], [0], [1], [0, 0, 1, 1], [], []>} : vector<16x8xbf16>, vector<8x32xbf16>, vector<16x32xf32> -> vector<16x32xf32>
    %7 = vector.broadcast %3 : vector<1x32xf32> to vector<16x32xf32>
    %8 = arith.addf %6, %7 : vector<16x32xf32>
    %cst_8 = arith.constant 0.000000e+00 : f32
    %9 = vector.broadcast %cst_8 : f32 to vector<16x32xf32>
    %10 = arith.maximumf %8, %9 : vector<16x32xf32>
    %11 = arith.truncf %10 : vector<16x32xf32> to vector<16x32xbf16>
    %c0_9 = arith.constant 0 : index
    %c0_10 = arith.constant 0 : index
    %12 = vector.load %arg4[%c0_9, %c0_10] : memref<32x32xbf16, #tpu.memory_space<vmem>>, vector<32x32xbf16>
    %c0_11 = arith.constant 0 : index
    %c0_12 = arith.constant 0 : index
    %13 = vector.load %arg5[%c0_11, %c0_12] : memref<1x32xf32, #tpu.memory_space<vmem>>, vector<1x32xf32>
    %cst_13 = arith.constant dense<0.000000e+00> : vector<16x32xf32>
    %14 = tpu.matmul %11, %12, %cst_13 {dimension_numbers = #tpu.dot_dimension_numbers<[1], [0], [0], [1], [0, 0, 1, 1], [], []>} : vector<16x32xbf16>, vector<32x32xbf16>, vector<16x32xf32> -> vector<16x32xf32>
    %15 = arith.truncf %14 : vector<16x32xf32> to vector<16x32xbf16>
    %cst_14 = arith.constant dense<0.000000e+00> : vector<16x32xf32>
    %16 = tpu.matmul %0, %15, %cst_14 {dimension_numbers = #tpu.dot_dimension_numbers<[1], [0], [0], [1], [0, 0, 1, 1], [], []>} : vector<16x16xbf16>, vector<16x32xbf16>, vector<16x32xf32> -> vector<16x32xf32>
    %17 = vector.broadcast %13 : vector<1x32xf32> to vector<16x32xf32>
    %18 = arith.addf %16, %17 : vector<16x32xf32>
    %cst_15 = arith.constant 0.000000e+00 : f32
    %19 = vector.broadcast %cst_15 : f32 to vector<16x32xf32>
    %20 = arith.maximumf %18, %19 : vector<16x32xf32>
    %c0_16 = arith.constant 0 : index
    %c0_17 = arith.constant 0 : index
    %21 = vector.load %arg8[%c0_16, %c0_17] : memref<16x32xf32, #tpu.memory_space<vmem>>, vector<16x32xf32>
    tpu.vector_store %arg8[%c0_16, %c0_17], %20 {strides = array<i32>} : memref<16x32xf32, #tpu.memory_space<vmem>>, vector<16x32xf32>,
    %22 = arith.truncf %20 : vector<16x32xf32> to vector<16x32xbf16>
    %c0_18 = arith.constant 0 : index
    %c0_19 = arith.constant 0 : index
    %23 = vector.load %arg6[%c0_18, %c0_19] : memref<32x8xbf16, #tpu.memory_space<vmem>>, vector<32x8xbf16>
    %c0_20 = arith.constant 0 : index
    %c0_21 = arith.constant 0 : index
    %24 = vector.load %arg7[%c0_20, %c0_21] : memref<1x8xf32, #tpu.memory_space<vmem>>, vector<1x8xf32>
    %cst_22 = arith.constant dense<0.000000e+00> : vector<16x8xf32>
    %25 = tpu.matmul %22, %23, %cst_22 {dimension_numbers = #tpu.dot_dimension_numbers<[1], [0], [0], [1], [0, 0, 1, 1], [], []>} : vector<16x32xbf16>, vector<32x8xbf16>, vector<16x8xf32> -> vector<16x8xf32>
    %26 = arith.truncf %25 : vector<16x8xf32> to vector<16x8xbf16>
    %cst_23 = arith.constant dense<0.000000e+00> : vector<16x8xf32>
    %27 = tpu.matmul %0, %26, %cst_23 {dimension_numbers = #tpu.dot_dimension_numbers<[1], [0], [0], [1], [0, 0, 1, 1], [], []>} : vector<16x16xbf16>, vector<16x8xbf16>, vector<16x8xf32> -> vector<16x8xf32>
    %28 = vector.broadcast %24 : vector<1x8xf32> to vector<16x8xf32>
    %29 = arith.addf %27, %28 : vector<16x8xf32>
    %c0_24 = arith.constant 0 : index
    %c0_25 = arith.constant 0 : index
    %30 = vector.load %arg9[%c0_24, %c0_25] : memref<16x8xf32, #tpu.memory_space<vmem>>, vector<16x8xf32>
    tpu.vector_store %arg9[%c0_24, %c0_25], %29 {strides = array<i32>} : memref<16x8xf32, #tpu.memory_space<vmem>>, vector<16x8xf32>,
    return
  }
}

</mosaic_0001>

<llo_original>
// kernel: tpu_custom_call.1
$region0: #{tpu_custom_call.1}
  #allocation0 [shape = 'u32[]', space=smem, size = 0x4, offset = 0x4, fixed_abs, tag = 'smem constant byte address 0x4 - core index']
  #allocation1 [shape = 'u32[72,128]{1,0:T(1,128)}', space=vmem, size = 0x9000, scoped, tag = 'internal scratch']
  %s0 = inlined_call_operand.vmem [shape: bf16[16,16], index: 0, kind: input, shape index: {}]
  %s1 = inlined_call_operand.vmem [shape: bf16[16,8], index: 1, kind: input, shape index: {}]
  %s2 = inlined_call_operand.vmem [shape: bf16[8,32], index: 2, kind: input, shape index: {}]
  %s3 = inlined_call_operand.vmem [shape: f32[1,32], index: 3, kind: input, shape index: {}]
  %s4 = inlined_call_operand.vmem [shape: bf16[32,32], index: 4, kind: input, shape index: {}]
  %s5 = inlined_call_operand.vmem [shape: f32[1,32], index: 5, kind: input, shape index: {}]
  %s6 = inlined_call_operand.vmem [shape: bf16[32,8], index: 6, kind: input, shape index: {}]
  %s7 = inlined_call_operand.vmem [shape: f32[1,8], index: 7, kind: input, shape index: {}]
  %s8 = inlined_call_operand.hbm [shape: f32[16,32], index: 8, kind: output, shape index: {0}]
  %s9 = inlined_call_operand.vmem [shape: f32[16,8], index: 9, kind: output, shape index: {1}]
  %10 = xla_tuple %s8, %s9
  %s11 = sld [smem:[#allocation0]]
  $region50: #{tpu_custom_call.1} parent=0
    _
  %s13 = ssub.s32 1, %s11
  %s14 = scalar_select 0, %s13, %s11
  $region1: #{tpu_custom_call.1} parent=0
    #allocation2 [shape = 'u8[8192]{0}', space=vmem, size = 0x2000, scoped, tag = 'output window, operand 0, single buffered']
    #allocation3 [shape = 's32[1]{0}', space=sflag, size = 0x4, scoped, tag = 'scoped memory for tpu_custom_call.1']
    %15 = vsyncpa [#allocation3], 0
    // Predicated region
    $region2: #{tpu_custom_call.1} parent=1 // pred_check
      _
    $region3: #{tpu_custom_call.1} parent=1 // pred_check_branch
      %17 = sbr.rel (0) target = $region5
    $region4: #{tpu_custom_call.1} parent=1 // pred_region
      _
    $region5: #{tpu_custom_call.1} parent=1 // pred_fallthru
      _
    // Predicated region
    $region6: #{tpu_custom_call.1} parent=1 // pred_check
      _
    $region7: #{tpu_custom_call.1} parent=1 // pred_check_branch
      %19 = sbr.rel (0) target = $region9
    $region8: #{tpu_custom_call.1} parent=1 // pred_region
      _
    $region9: #{tpu_custom_call.1} parent=1 // pred_fallthru
      _
    // Predicated region
    $region10: #{tpu_custom_call.1} parent=1 // pred_check
      _
    $region11: #{tpu_custom_call.1} parent=1 // pred_check_branch
      %21 = sbr.rel (0) target = $region13
    $region12: #{tpu_custom_call.1} parent=1 // pred_region
      _
    $region13: #{tpu_custom_call.1} parent=1 // pred_fallthru
      _
    // Predicated region
    $region14: #{tpu_custom_call.1} parent=1 // pred_check
      _
    $region15: #{tpu_custom_call.1} parent=1 // pred_check_branch
      %23 = sbr.rel (0) target = $region17
    $region16: #{tpu_custom_call.1} parent=1 // pred_region
      _
    $region17: #{tpu_custom_call.1} parent=1 // pred_fallthru
      _
    // Predicated region
    $region18: #{tpu_custom_call.1} parent=1 // pred_check
      _
    $region19: #{tpu_custom_call.1} parent=1 // pred_check_branch
      %25 = sbr.rel (0) target = $region21
    $region20: #{tpu_custom_call.1} parent=1 // pred_region
      _
    $region21: #{tpu_custom_call.1} parent=1 // pred_fallthru
      _
    // Predicated region
    $region22: #{tpu_custom_call.1} parent=1 // pred_check
      _
    $region23: #{tpu_custom_call.1} parent=1 // pred_check_branch
      %27 = sbr.rel (0) target = $region25
    $region24: #{tpu_custom_call.1} parent=1 // pred_region
      _
    $region25: #{tpu_custom_call.1} parent=1 // pred_fallthru
      _
    // Predicated region
    $region26: #{tpu_custom_call.1} parent=1 // pred_check
      _
    $region27: #{tpu_custom_call.1} parent=1 // pred_check_branch
      %29 = sbr.rel (0) target = $region29
    $region28: #{tpu_custom_call.1} parent=1 // pred_region
      _
    $region29: #{tpu_custom_call.1} parent=1 // pred_fallthru
      _
    // Predicated region
    $region30: #{tpu_custom_call.1} parent=1 // pred_check
      _
    $region31: #{tpu_custom_call.1} parent=1 // pred_check_branch
      %31 = sbr.rel (0) target = $region33
    $region32: #{tpu_custom_call.1} parent=1 // pred_region
      _
    $region33: #{tpu_custom_call.1} parent=1 // pred_fallthru
      _
    %v33 = vld [vmem:[%s0] sm:$0xf]
    %v34 = vld [vmem:[%s0 + $0x4] sm:$0xf]
    %v35 = vld [vmem:[%s1] sm:$0xf]
    %v36 = vld [vmem:[%s1 + $0x4] sm:$0xf]
    %v37 = vld [vmem:[%s2] sm:$0xf]
    %v38 = vld [vmem:[%s3] sm:$0x1]
    %v41 = vunpack.c.l.b16 %v33
    %v42 = vunpack.c.l.b16 %v34
    %v43 = vpack.c.b16 %v42, %v41
    %v46 = vunpack.c.l.b16 %v35
    %v47 = vunpack.c.l.b16 %v36
    %v48 = vpack.c.b16 %v47, %v46
    %vm50 = vcmask 130048
    %v52 = vsel %vm50, %v43, 0
    %54 = vmatpush.bf16.msra.mxu0 0
    %55 = vmatpush.bf16.msra.mxu0 0
    %56 = vmatpush.bf16.msra.mxu0 0
    %57 = vmatpush.bf16.msra.mxu0 0
    %58 = vmatpush.bf16.msra.mxu0 0
    %59 = vmatpush.bf16.msra.mxu0 0
    %60 = vmatpush.bf16.msra.mxu0 0
    %61 = vmatpush.bf16.msra.mxu0 %v48
    %62 = vmatmul.bf16.gmra.mxu0 %v52
    %v63 = vpop.f32.mrf.mxu0
    %v64 = vadd.f32 0.0, %v63
    %v65 = vpop.f32.mrf.mxu0
    %v66 = vadd.f32 0.0, %v65
    %67 = vdwg.mxu0
    %v68 = vpack.c.bf16 %v66, %v64
    %v70 = vperm.slane %v38, 0
    %vm72 = vcmask 64512
    %v74 = vsel %vm72, %v68, 0
    %vm76 = vcmask 1043456
    %v78 = vsel %vm76, %v37, 0
    %80 = vmatpush.bf16.msra.mxu0 0
    %81 = vmatpush.bf16.msra.mxu0 0
    %82 = vmatpush.bf16.msra.mxu0 0
    %83 = vmatpush.bf16.msra.mxu0 0
    %84 = vmatpush.bf16.msra.mxu0 0
    %85 = vmatpush.bf16.msra.mxu0 0
    %86 = vmatpush.bf16.msra.mxu0 0
    %87 = vmatpush.bf16.msra.mxu0 %v78
    %88 = vmatmul.bf16.gmra.mxu0 %v74
    %v89 = vpop.f32.mrf.mxu0
    %v90 = vadd.f32 %v70, %v89
    %v91 = vpop.f32.mrf.mxu0
    %v92 = vadd.f32 %v70, %v91
    %93 = vdwg.mxu0
    %v94 = vmax.f32 %v90, 0.0
    %v95 = vmax.f32 %v92, 0.0
    %v96 = vpack.c.bf16 %v95, %v94
    %v97 = vld [vmem:[%s4] sm:$0xf]
    %v98 = vld [vmem:[%s4 + $0x4] sm:$0xf]
    %v99 = vld [vmem:[%s4 + $0x8] sm:$0xf]
    %v100 = vld [vmem:[%s4 + $0xc] sm:$0xf]
    %v101 = vld [vmem:[%s5] sm:$0x1]
    %v106 = vunpack.c.l.b16 %v97
    %v107 = vunpack.c.l.b16 %v98
    %v108 = vunpack.c.l.b16 %v99
    %v109 = vunpack.c.l.b16 %v100
    %v110 = vpack.c.b16 %v107, %v106
    %v111 = vpack.c.b16 %v109, %v108
    %vm114 = vcmask 261120
    %v116 = vsel %vm114, %v96, 0
    %118 = vmatpush.bf16.msra.mxu0 0
    %119 = vmatpush.bf16.msra.mxu0 0
    %120 = vmatpush.bf16.msra.mxu0 0
    %121 = vmatpush.bf16.msra.mxu0 0
    %122 = vmatpush.bf16.msra.mxu0 0
    %123 = vmatpush.bf16.msra.mxu0 0
    %124 = vmatpush.bf16.msra.mxu0 %v111
    %125 = vmatpush.bf16.msra.mxu0 %v110
    %126 = vmatmul.bf16.gmra.mxu0 %v116
    %v127 = vpop.f32.mrf.mxu0
    %v128 = vadd.f32 0.0, %v127
    %v129 = vpop.f32.mrf.mxu0
    %v130 = vadd.f32 0.0, %v129
    %131 = vdwg.mxu0
    %v132 = vpack.c.bf16 %v130, %v128
    %v134 = vperm.slane %v101, 0
    %136 = vmatpush.bf16.msra.mxu0 0
    %137 = vmatpush.bf16.msra.mxu0 0
    %138 = vmatpush.bf16.msra.mxu0 0
    %139 = vmatpush.bf16.msra.mxu0 0
    %140 = vmatpush.bf16.msra.mxu0 0
    %141 = vmatpush.bf16.msra.mxu0 0
    %142 = vmatpush.bf16.msra.mxu0 0
    %143 = vmatpush.bf16.msra.mxu0 %v132
    %144 = vmatmul.bf16.gmra.mxu0 %v52
    %v145 = vpop.f32.mrf.mxu0
    %v146 = vadd.f32 %v134, %v145
    %v147 = vpop.f32.mrf.mxu0
    %v148 = vadd.f32 %v134, %v147
    %149 = vdwg.mxu0
    %v150 = vmax.f32 %v146, 0.0
    %v151 = vmax.f32 %v148, 0.0
    %152 = vst.msk [vmem:[#allocation2] sm:$0xff] %vm114, %v150
    %153 = vst.msk [vmem:[#allocation2 + $0x8] sm:$0xff] %vm114, %v151
    %v154 = vpack.c.bf16 %v151, %v150
    %v155 = vld [vmem:[%s6] sm:$0xf]
    %v156 = vld [vmem:[%s6 + $0x4] sm:$0xf]
    %v157 = vld [vmem:[%s6 + $0x8] sm:$0xf]
    %v158 = vld [vmem:[%s6 + $0xc] sm:$0xf]
    %v159 = vld [vmem:[%s7] sm:$0x1]
    %v164 = vunpack.c.l.b16 %v155
    %v165 = vunpack.c.l.b16 %v156
    %v166 = vunpack.c.l.b16 %v157
    %v167 = vunpack.c.l.b16 %v158
    %v168 = vpack.c.b16 %v165, %v164
    %v169 = vpack.c.b16 %v167, %v166
    %v173 = vsel %vm114, %v154, 0
    %175 = vmatpush.bf16.msra.mxu0 0
    %176 = vmatpush.bf16.msra.mxu0 0
    %177 = vmatpush.bf16.msra.mxu0 0
    %178 = vmatpush.bf16.msra.mxu0 0
    %179 = vmatpush.bf16.msra.mxu0 0
    %180 = vmatpush.bf16.msra.mxu0 0
    %181 = vmatpush.bf16.msra.mxu0 %v169
    %182 = vmatpush.bf16.msra.mxu0 %v168
    %183 = vmatmul.bf16.gmra.mxu0 %v173
    %v184 = vpop.f32.mrf.mxu0
    %v185 = vadd.f32 0.0, %v184
    %v186 = vpop.f32.mrf.mxu0
    %v187 = vadd.f32 0.0, %v186
    %188 = vdwg.mxu0
    %v189 = vpack.c.bf16 %v187, %v185
    %v191 = vperm.slane %v159, 0
    %193 = vmatpush.bf16.msra.mxu0 0
    %194 = vmatpush.bf16.msra.mxu0 0
    %195 = vmatpush.bf16.msra.mxu0 0
    %196 = vmatpush.bf16.msra.mxu0 0
    %197 = vmatpush.bf16.msra.mxu0 0
    %198 = vmatpush.bf16.msra.mxu0 0
    %199 = vmatpush.bf16.msra.mxu0 0
    %200 = vmatpush.bf16.msra.mxu0 %v189
    %201 = vmatmul.bf16.gmra.mxu0 %v52
    %v202 = vpop.f32.mrf.mxu0
    %v203 = vadd.f32 %v191, %v202
    %v204 = vpop.f32.mrf.mxu0
    %v205 = vadd.f32 %v191, %v204
    %206 = vdwg.mxu0
    %207 = vst.msk [vmem:[%s9] sm:$0xff] %vm72, %v203
    %208 = vst.msk [vmem:[%s9 + $0x8] sm:$0xff] %vm72, %v205
    // Predicated region
    $region34: #{tpu_custom_call.1} parent=1 // pred_check
      _
    $region35: #{tpu_custom_call.1} parent=1 // pred_check_branch
      %210 = sbr.rel (0) target = $region37
    $region36: #{tpu_custom_call.1} parent=1 // pred_region
      %212 = vsyncadd [#allocation3], 0
      %s213 = sshll.u32 [#allocation2], 4
      %s214 = int_to_ptr.vmem [resolvable:$true] %s213
      %s215 = sshll.u32 %s8, 4
      %s216 = int_to_ptr.hbm [resolvable:$true] %s215
      %221 = dma.vmem_to_hbm [thread:$0]  %s214, 256, %s216, [#allocation3], 128, 128, 8
    $region37: #{tpu_custom_call.1} parent=1 // pred_fallthru
      _
    // Predicated region
    $region38: #{tpu_custom_call.1} parent=1 // pred_check
      _
    $region39: #{tpu_custom_call.1} parent=1 // pred_check_branch
      %223 = sbr.rel (0) target = $region41
    $region40: #{tpu_custom_call.1} parent=1 // pred_region
      _
    $region41: #{tpu_custom_call.1} parent=1 // pred_fallthru
      _
    // Predicated region
    $region42: #{tpu_custom_call.1} parent=1 // pred_check
      _
    $region43: #{tpu_custom_call.1} parent=1 // pred_check_branch
      %225 = sbr.rel (0) target = $region45
    $region44: #{tpu_custom_call.1} parent=1 // pred_region
      %227 = dma.done [#allocation3], 256
    $region45: #{tpu_custom_call.1} parent=1 // pred_fallthru
      _
    // Predicated region
    $region46: #{tpu_custom_call.1} parent=1 // pred_check
      _
    $region47: #{tpu_custom_call.1} parent=1 // pred_check_branch
      %229 = sbr.rel (0) target = $region49
    $region48: #{tpu_custom_call.1} parent=1 // pred_region
      _
    $region49: #{tpu_custom_call.1} parent=1 // pred_fallthru
      _
    %230 = vsyncpa [#allocation3], 1

</llo_original>
